<compile_context>
chip_gen: v7x
topology: tpu7x:2x2x1
jax: 0.10.0
libtpu: 0.0.40
codegen_flags: <defaults>
</compile_context>

<pallas_src>
import functools

import jax
import jax.numpy as jnp
from jax.experimental import pallas as pl
from jax.experimental.pallas import tpu as pltpu


def _round_up(a, b):
    return (a + b - 1) // b * b


# ---------------------------------------------------------------------------
# Kernels
# ---------------------------------------------------------------------------
def _ffwd_resident_kernel(x_ref, w1_ref, b1_ref, w2_ref, b2_ref, o_ref, *, negative_slope):
    """1-D grid over row tiles; full (padded) W1/W2 stay VMEM-resident."""
    h = jnp.dot(x_ref[...], w1_ref[...], preferred_element_type=jnp.float32)
    h = h + b1_ref[...].astype(jnp.float32)
    h = jnp.maximum(h, negative_slope * h)                      # LeakyReLU (slope in [0,1])
    out = jnp.dot(h.astype(w2_ref.dtype), w2_ref[...], preferred_element_type=jnp.float32)
    out = out + b2_ref[...].astype(jnp.float32)
    o_ref[...] = out.astype(o_ref.dtype)                        # Dropout: eval-mode identity


def _ffwd_tiled_kernel(x_ref, w1_ref, b1_ref, w2_ref, b2_ref, o_ref, *acc_scratch,
                       negative_slope):
    """2-D grid (row_tiles, hidden_tiles); hidden axis is the reduction axis.

    If a scratch ref is supplied it is the f32 accumulator; otherwise (f32
    output) we accumulate directly into the resident output block.
    """
    acc_ref = acc_scratch[0] if acc_scratch else o_ref
    j = pl.program_id(1)

    @pl.when(j == 0)
    def _init():
        # Fold b2 into the accumulator init: one broadcast per row tile.
        acc_ref[...] = jnp.broadcast_to(b2_ref[...].astype(acc_ref.dtype), acc_ref.shape)

    h = jnp.dot(x_ref[...], w1_ref[...], preferred_element_type=jnp.float32)
    h = h + b1_ref[...].astype(jnp.float32)
    h = jnp.maximum(h, negative_slope * h)
    acc_ref[...] += jnp.dot(
        h.astype(w2_ref.dtype), w2_ref[...], preferred_element_type=jnp.float32
    ).astype(acc_ref.dtype)

    if acc_scratch:
        @pl.when(j == pl.num_programs(1) - 1)
        def _finalize():
            o_ref[...] = acc_ref[...].astype(o_ref.dtype)        # Dropout: eval-mode identity


# ---------------------------------------------------------------------------
# Wrapper
# ---------------------------------------------------------------------------
def feed_forward(x, w1, b1, w2, b2, *, negative_slope=0.01, tm=None, th=512,
                 force_stream=False):
    """x: (B, T, C). w1: (C, 4C), b1: (4C,), w2: (4C, C), b2: (C,). Returns (B, T, C)."""
    B, T, C = x.shape
    H = w1.shape[1]
    assert w1.shape == (C, H) and b1.shape == (H,)
    assert w2.shape == (H, C) and b2.shape == (C,)
    N = B * T

    in_size = jnp.dtype(x.dtype).itemsize
    w_size = jnp.dtype(w1.dtype).itemsize

    # Sublane packing granularity for the row tile: 8 (f32), 16 (bf16), 32 (int8/fp8).
    pack = max(8, 32 // max(in_size, 1))

    # Lane-dense padding of the feature dims -> unmasked vst on the output path.
    Cp = _round_up(C, 128)
    Hp = _round_up(H, 128)

    # Physical VMEM on this generation (v5e/v6e: 128 MiB, v7x: 64 MiB per TC).
    try:
        vmem_cap = int(pltpu.get_tpu_info().vmem_capacity_bytes)
    except Exception:
        vmem_cap = 64 << 20  # conservative (v7x) fallback
    vmem_budget = int(0.75 * vmem_cap)

    def vmem_need(tm_e, th_e, use_acc):
        need = 2 * tm_e * Cp * in_size                 # x row tile (double buffered)
        need += 2 * tm_e * Cp * in_size                # output row tile
        need += 2 * (Cp * th_e + th_e * Cp) * w_size   # W1 / W2 slices
        need += 2 * (th_e + Cp) * w_size               # bias slices
        if use_acc:
            need += tm_e * Cp * 4                      # resident f32 accumulator
        return need

    # ---- decide weight residency -------------------------------------------------
    tm_probe = min(_round_up(256, pack), _round_up(N, pack))
    resident = (not force_stream) and vmem_need(tm_probe, Hp, use_acc=False) <= vmem_budget

    if resident:
        th_eff = Hp
        use_acc = False
        tm_target = tm if tm is not None else 512
    else:
        # Largest 128-multiple divisor of Hp not exceeding the requested th.
        th_eff = min(_round_up(th, 128), Hp)
        while Hp % th_eff != 0:
            th_eff -= 128
        use_acc = jnp.dtype(x.dtype) != jnp.dtype(jnp.float32)
        # Streaming weights needs a larger row tile to clear the flops/byte roofline.
        tm_target = tm if tm is not None else 1024

    # ---- row tile ------------------------------------------------------------------
    tm_eff = min(_round_up(tm_target, pack), _round_up(N, pack))
    while tm_eff > pack and vmem_need(tm_eff, th_eff, use_acc) > vmem_budget:
        tm_eff = _round_up(max(tm_eff // 2, pack), pack)
    N_pad = _round_up(N, tm_eff)
    row_tiles = N_pad // tm_eff
    # Keep >= 2 row tiles when there is enough work (v7x megacore: 2 TensorCores).
    if row_tiles == 1 and N > 2 * pack:
        tm_eff = _round_up(-(-N // 2), pack)
        N_pad = 2 * tm_eff
        row_tiles = 2

    need = vmem_need(tm_eff, th_eff, use_acc)
    vmem_limit = int(min(max(int(need * 1.25), 16 << 20) + (2 << 20), int(0.95 * vmem_cap)))

    # ---- pad inputs (zeros so the math is unchanged; result sliced back) -----------
    x2d = x.reshape(N, C)
    if N_pad != N or Cp != C:
        x2d = jnp.pad(x2d, ((0, N_pad - N), (0, Cp - C)))
    w1p = jnp.pad(w1, ((0, Cp - C), (0, Hp - H))) if (Cp != C or Hp != H) else w1
    w2p = jnp.pad(w2, ((0, Hp - H), (0, Cp - C))) if (Cp != C or Hp != H) else w2
    b1p = (jnp.pad(b1, ((0, Hp - H),)) if Hp != H else b1).reshape(1, Hp)
    b2p = (jnp.pad(b2, ((0, Cp - C),)) if Cp != C else b2).reshape(1, Cp)

    # ---- grid / specs ----------------------------------------------------------------
    if resident:
        kernel = functools.partial(_ffwd_resident_kernel, negative_slope=negative_slope)
        grid = (row_tiles,)
        in_specs = [
            pl.BlockSpec((tm_eff, Cp), lambda i: (i, 0)),   # x row tile
            pl.BlockSpec((Cp, Hp), lambda i: (0, 0)),       # W1 (resident)
            pl.BlockSpec((1, Hp), lambda i: (0, 0)),        # b1 (resident)
            pl.BlockSpec((Hp, Cp), lambda i: (0, 0)),       # W2 (resident)
            pl.BlockSpec((1, Cp), lambda i: (0, 0)),        # b2 (resident)
        ]
        out_specs = pl.BlockSpec((tm_eff, Cp), lambda i: (i, 0))
        scratch = []
        dim_sem = ("parallel",)
    else:
        kernel = functools.partial(_ffwd_tiled_kernel, negative_slope=negative_slope)
        n_h = Hp // th_eff
        grid = (row_tiles, n_h)
        in_specs = [
            pl.BlockSpec((tm_eff, Cp), lambda i, j: (i, 0)),   # x row tile
            pl.BlockSpec((Cp, th_eff), lambda i, j: (0, j)),   # W1 slice
            pl.BlockSpec((1, th_eff), lambda i, j: (0, j)),    # b1 slice
            pl.BlockSpec((th_eff, Cp), lambda i, j: (j, 0)),   # W2 slice
            pl.BlockSpec((1, Cp), lambda i, j: (0, 0)),        # b2 (constant)
        ]
        out_specs = pl.BlockSpec((tm_eff, Cp), lambda i, j: (i, 0))
        scratch = [pltpu.VMEM((tm_eff, Cp), jnp.float32)] if use_acc else []
        dim_sem = ("parallel", "arbitrary")

    # ---- cost hint -------------------------------------------------------------------
    w_bytes_once = (Cp * Hp + Hp * Cp + Hp + Cp) * w_size
    cost = pl.CostEstimate(
        flops=int(4 * N_pad * Cp * Hp),                       # two matmuls, 2 flops/MAC
        transcendentals=0,
        bytes_accessed=int(2 * N_pad * Cp * in_size
                           + (1 if resident else row_tiles) * w_bytes_once),
    )

    out2d = pl.pallas_call(
        kernel,
        out_shape=jax.ShapeDtypeStruct((N_pad, Cp), x.dtype),
        grid_spec=pltpu.PrefetchScalarGridSpec(
            num_scalar_prefetch=0,
            grid=grid,
            in_specs=in_specs,
            out_specs=out_specs,
            scratch_shapes=scratch,
        ),
        compiler_params=pltpu.CompilerParams(
            dimension_semantics=dim_sem,
            vmem_limit_bytes=vmem_limit,
        ),
        cost_estimate=cost,
    )(x2d, w1p, b1p, w2p, b2p)

    return out2d[:N, :C].reshape(B, T, C)


# ---------------------------------------------------------------------------
# Reference + tests
# ---------------------------------------------------------------------------
def _reference(x, w1, b1, w2, b2, negative_slope=0.01):
    h = x @ w1 + b1
    h = jnp.where(h > 0, h, negative_slope * h)
    return h @ w2 + b2


def _make_params(key, C, H, dtype=jnp.float32):
    kx, kw1, kb1, kw2, kb2 = jax.random.split(key, 5)
    w1 = jax.random.uniform(kw1, (C, H), jnp.float32, -1.0 / C**0.5, 1.0 / C**0.5)
    b1 = jax.random.uniform(kb1, (H,), jnp.float32, -1.0 / C**0.5, 1.0 / C**0.5)
    w2 = jax.random.uniform(kw2, (H, C), jnp.float32, -1.0 / H**0.5, 1.0 / H**0.5)
    b2 = jax.random.uniform(kb2, (C,), jnp.float32, -1.0 / H**0.5, 1.0 / H**0.5)
    return kx, w1.astype(dtype), b1.astype(dtype), w2.astype(dtype), b2.astype(dtype)


if __name__ == "__main__":
    negative_slope = 0.01
    key = jax.random.PRNGKey(0)

    # --- Test 1: small shapes consistent with the module (batch=2, seq=8, n_embd=32),
    #             f32, weight-resident path. Exact check against pure-JAX reference.
    B, T, C = 2, 8, 32
    H = 4 * C
    kx, w1, b1, w2, b2 = _make_params(key, C, H)
    x = jax.random.normal(kx, (B, T, C), dtype=jnp.float32)
    out = jax.block_until_ready(feed_forward(x, w1, b1, w2, b2, negative_slope=negative_slope))
    ref = _reference(x, w1, b1, w2, b2, negative_slope)
    assert out.shape == (B, T, C)
    assert jnp.allclose(out, ref, atol=1e-4, rtol=1e-4), "resident f32 mismatch vs reference"

    # --- Test 2: bf16 mixed precision on the resident path (f32 MXU accumulation); smoke check.
    out_bf16 = jax.block_until_ready(feed_forward(
        x.astype(jnp.bfloat16),
        w1.astype(jnp.bfloat16), b1.astype(jnp.bfloat16),
        w2.astype(jnp.bfloat16), b2.astype(jnp.bfloat16),
        negative_slope=negative_slope))
    assert out_bf16.shape == (B, T, C)
    assert bool(jnp.all(jnp.isfinite(out_bf16.astype(jnp.float32))))

    # --- Test 3: exercise the streamed-weight (tiled-hidden) path with >1 hidden tile.
    C2 = 64
    H2 = 4 * C2
    kx2, w1b, b1b, w2b, b2b = _make_params(jax.random.PRNGKey(1), C2, H2)
    x2 = jax.random.normal(kx2, (B, T, C2), dtype=jnp.float32)
    out2 = jax.block_until_ready(feed_forward(
        x2, w1b, b1b, w2b, b2b, negative_slope=negative_slope, th=128, force_stream=True))
    ref2 = _reference(x2, w1b, b1b, w2b, b2b, negative_slope)
    assert jnp.allclose(out2, ref2, atol=1e-4, rtol=1e-4), "tiled f32 mismatch vs reference"

    # --- Test 4: tiled path with bf16 (uses the f32 accumulator scratch); smoke check.
    out2_bf16 = jax.block_until_ready(feed_forward(
        x2.astype(jnp.bfloat16),
        w1b.astype(jnp.bfloat16), b1b.astype(jnp.bfloat16),
        w2b.astype(jnp.bfloat16), b2b.astype(jnp.bfloat16),
        negative_slope=negative_slope, th=128, force_stream=True))
    assert out2_bf16.shape == (B, T, C2)
    assert bool(jnp.all(jnp.isfinite(out2_bf16.astype(jnp.float32))))

    print("KERNEL_OK")
</pallas_src>

<mosaic_0001>
module attributes {stable_mosaic.version = 11 : i64} {
  func.func @_ffwd_resident_kernel(%arg0: i32, %arg1: memref<16x128xf32, #tpu.memory_space<vmem>>, %arg2: memref<128x128xf32, #tpu.memory_space<vmem>>, %arg3: memref<1x128xf32, #tpu.memory_space<vmem>>, %arg4: memref<128x128xf32, #tpu.memory_space<vmem>>, %arg5: memref<1x128xf32, #tpu.memory_space<vmem>>, %arg6: memref<16x128xf32, #tpu.memory_space<vmem>>) attributes {dimension_semantics = [#tpu.dimension_semantics<parallel>], iteration_bounds = array<i64: 1>, scalar_prefetch = 0 : i64, scratch_operands = 0 : i64, tpu.core_type = #tpu.core_type<tc>, window_params = [{transform_indices = @transform_0, window_bounds = array<i64: 16, 128>}, {pipeline_mode = #tpu.pipeline_mode<synchronous>, transform_indices = @transform_1, window_bounds = array<i64: 128, 128>}, {pipeline_mode = #tpu.pipeline_mode<synchronous>, transform_indices = @transform_2, window_bounds = array<i64: 1, 128>}, {pipeline_mode = #tpu.pipeline_mode<synchronous>, transform_indices = @transform_3, window_bounds = array<i64: 128, 128>}, {pipeline_mode = #tpu.pipeline_mode<synchronous>, transform_indices = @transform_4, window_bounds = array<i64: 1, 128>}, {transform_indices = @transform_5, window_bounds = array<i64: 16, 128>}]} {
    %c0 = arith.constant 0 : index
    %c0_0 = arith.constant 0 : index
    %0 = vector.load %arg1[%c0, %c0_0] : memref<16x128xf32, #tpu.memory_space<vmem>>, vector<16x128xf32>
    %c0_1 = arith.constant 0 : index
    %c0_2 = arith.constant 0 : index
    %1 = vector.load %arg2[%c0_1, %c0_2] : memref<128x128xf32, #tpu.memory_space<vmem>>, vector<128x128xf32>
    %cst = arith.constant dense<0.000000e+00> : vector<16x128xf32>
    %2 = tpu.matmul %0, %1, %cst {dimension_numbers = #tpu.dot_dimension_numbers<[1], [0], [0], [1], [0, 0, 1, 1], [], []>} : vector<16x128xf32>, vector<128x128xf32>, vector<16x128xf32> -> vector<16x128xf32>
    %c0_3 = arith.constant 0 : index
    %c0_4 = arith.constant 0 : index
    %3 = vector.load %arg3[%c0_3, %c0_4] : memref<1x128xf32, #tpu.memory_space<vmem>>, vector<1x128xf32>
    %4 = vector.broadcast %3 : vector<1x128xf32> to vector<16x128xf32>
    %5 = arith.addf %2, %4 : vector<16x128xf32>
    %cst_5 = arith.constant 0.00999999977 : f32
    %6 = vector.broadcast %cst_5 : f32 to vector<16x128xf32>
    %7 = arith.mulf %6, %5 : vector<16x128xf32>
    %8 = arith.maximumf %5, %7 : vector<16x128xf32>
    %c0_6 = arith.constant 0 : index
    %c0_7 = arith.constant 0 : index
    %9 = vector.load %arg4[%c0_6, %c0_7] : memref<128x128xf32, #tpu.memory_space<vmem>>, vector<128x128xf32>
    %cst_8 = arith.constant dense<0.000000e+00> : vector<16x128xf32>
    %10 = tpu.matmul %8, %9, %cst_8 {dimension_numbers = #tpu.dot_dimension_numbers<[1], [0], [0], [1], [0, 0, 1, 1], [], []>} : vector<16x128xf32>, vector<128x128xf32>, vector<16x128xf32> -> vector<16x128xf32>
    %c0_9 = arith.constant 0 : index
    %c0_10 = arith.constant 0 : index
    %11 = vector.load %arg5[%c0_9, %c0_10] : memref<1x128xf32, #tpu.memory_space<vmem>>, vector<1x128xf32>
    %12 = vector.broadcast %11 : vector<1x128xf32> to vector<16x128xf32>
    %13 = arith.addf %10, %12 : vector<16x128xf32>
    %c0_11 = arith.constant 0 : index
    %c0_12 = arith.constant 0 : index
    %14 = vector.load %arg6[%c0_11, %c0_12] : memref<16x128xf32, #tpu.memory_space<vmem>>, vector<16x128xf32>
    tpu.vector_store %arg6[%c0_11, %c0_12], %13 {strides = array<i32>} : memref<16x128xf32, #tpu.memory_space<vmem>>, vector<16x128xf32>,
    return
  }
  func.func @transform_0(%arg0: i32) -> (i32, i32) {
    %c0_i32 = arith.constant 0 : i32
    %c0_i32_0 = arith.constant 0 : i32
    return %arg0, %c0_i32 : i32, i32
  }
  func.func @transform_1(%arg0: i32) -> (i32, i32) {
    %c0_i32 = arith.constant 0 : i32
    %c0_i32_0 = arith.constant 0 : i32
    %c0_i32_1 = arith.constant 0 : i32
    return %c0_i32, %c0_i32_0 : i32, i32
  }
  func.func @transform_2(%arg0: i32) -> (i32, i32) {
    %c0_i32 = arith.constant 0 : i32
    %c0_i32_0 = arith.constant 0 : i32
    %c0_i32_1 = arith.constant 0 : i32
    return %c0_i32, %c0_i32_0 : i32, i32
  }
  func.func @transform_3(%arg0: i32) -> (i32, i32) {
    %c0_i32 = arith.constant 0 : i32
    %c0_i32_0 = arith.constant 0 : i32
    %c0_i32_1 = arith.constant 0 : i32
    return %c0_i32, %c0_i32_0 : i32, i32
  }
  func.func @transform_4(%arg0: i32) -> (i32, i32) {
    %c0_i32 = arith.constant 0 : i32
    %c0_i32_0 = arith.constant 0 : i32
    %c0_i32_1 = arith.constant 0 : i32
    return %c0_i32, %c0_i32_0 : i32, i32
  }
  func.func @transform_5(%arg0: i32) -> (i32, i32) {
    %c0_i32 = arith.constant 0 : i32
    %c0_i32_0 = arith.constant 0 : i32
    return %arg0, %c0_i32 : i32, i32
  }
}

</mosaic_0001>

<llo_original>
// kernel: tpu_custom_call.1
$region0: #{tpu_custom_call.1}
  #allocation0 [shape = 'u32[]', space=smem, size = 0x4, offset = 0x4, fixed_abs, tag = 'smem constant byte address 0x4 - core index']
  #allocation1 [shape = 'u32[144,128]{1,0:T(1,128)}', space=vmem, size = 0x12000, scoped, tag = 'internal scratch']
  %s0 = inlined_call_operand.hbm [shape: f32[16,128], index: 0, kind: input, shape index: {}]
  %s1 = inlined_call_operand.hbm [shape: f32[128,128], index: 1, kind: input, shape index: {}]
  %s2 = inlined_call_operand.vmem [shape: f32[1,128], index: 2, kind: input, shape index: {}]
  %s3 = inlined_call_operand.hbm [shape: f32[128,128], index: 3, kind: input, shape index: {}]
  %s4 = inlined_call_operand.vmem [shape: f32[1,128], index: 4, kind: input, shape index: {}]
  %s5 = inlined_call_operand.hbm [shape: f32[16,128], index: 5, kind: output, shape index: {}]
  %s6 = sld [smem:[#allocation0]]
  $region42: #{tpu_custom_call.1} parent=0
    _
  %s8 = ssub.s32 1, %s6
  %s9 = scalar_select 0, %s8, %s6
  $region1: #{tpu_custom_call.1} parent=0
    #allocation2 [shape = 'u8[8192]{0}', space=vmem, size = 0x2000, scoped, tag = 'input window, operand 0, single buffered']
    #allocation3 [shape = 's32[1]{0}', space=sflag, size = 0x4, scoped, tag = 'scoped memory for tpu_custom_call.1']
    #allocation4 [shape = 's32[1]{0}', space=sflag, size = 0x4, scoped, tag = 'scoped memory for tpu_custom_call.1']
    #allocation5 [shape = 'u8[65536]{0}', space=vmem, size = 0x10000, scoped, tag = 'input window, operand 1, single buffered']
    #allocation6 [shape = 's32[1]{0}', space=sflag, size = 0x4, scoped, tag = 'scoped memory for tpu_custom_call.1']
    #allocation7 [shape = 'u8[65536]{0}', space=vmem, size = 0x10000, scoped, tag = 'input window, operand 3, single buffered']
    #allocation8 [shape = 'u8[8192]{0}', space=vmem, size = 0x2000, scoped, tag = 'output window, operand 0, single buffered']
    %10 = vsyncpa [#allocation3], 0
    %11 = vsyncpa [#allocation6], 0
    %12 = vsyncpa [#allocation4], 0
    // Predicated region
    $region2: #{tpu_custom_call.1} parent=1 // pred_check
      _
    $region3: #{tpu_custom_call.1} parent=1 // pred_check_branch
      %14 = sbr.rel (0) target = $region5
    $region4: #{tpu_custom_call.1} parent=1 // pred_region
      %s16 = ssub.s32 256, 256
      %17 = vsyncadd [#allocation3], %s16
      %s18 = sshll.u32 [#allocation2], 4
      %s19 = int_to_ptr.vmem [resolvable:$true] %s18
      %24 = dma.hbm_to_vmem [thread:$0]  %s0, 256, %s19, [#allocation3], 128, 128, 8
    $region5: #{tpu_custom_call.1} parent=1 // pred_fallthru
      _
    // Predicated region
    $region6: #{tpu_custom_call.1} parent=1 // pred_check
      _
    $region7: #{tpu_custom_call.1} parent=1 // pred_check_branch
      %26 = sbr.rel (0) target = $region9
    $region8: #{tpu_custom_call.1} parent=1 // pred_region
      %s28 = ssub.s32 2048, 2048
      %29 = vsyncadd [#allocation6], %s28
      %s30 = sshll.u32 [#allocation5], 4
      %s31 = int_to_ptr.vmem [resolvable:$true] %s30
      %36 = dma.hbm_to_vmem [thread:$0]  %s1, 2048, %s31, [#allocation6], 128, 128, 8
    $region9: #{tpu_custom_call.1} parent=1 // pred_fallthru
      _
    // Predicated region
    $region10: #{tpu_custom_call.1} parent=1 // pred_check
      _
    $region11: #{tpu_custom_call.1} parent=1 // pred_check_branch
      %38 = sbr.rel (0) target = $region13
    $region12: #{tpu_custom_call.1} parent=1 // pred_region
      _
    $region13: #{tpu_custom_call.1} parent=1 // pred_fallthru
      _
    // Predicated region
    $region14: #{tpu_custom_call.1} parent=1 // pred_check
      _
    $region15: #{tpu_custom_call.1} parent=1 // pred_check_branch
      %40 = sbr.rel (0) target = $region17
    $region16: #{tpu_custom_call.1} parent=1 // pred_region
      %s42 = ssub.s32 2048, 2048
      %43 = vsyncadd [#allocation6], %s42
      %s44 = sshll.u32 [#allocation7], 4
      %s45 = int_to_ptr.vmem [resolvable:$true] %s44
      %50 = dma.hbm_to_vmem [thread:$0]  %s3, 2048, %s45, [#allocation6], 128, 128, 8
    $region17: #{tpu_custom_call.1} parent=1 // pred_fallthru
      _
    // Predicated region
    $region18: #{tpu_custom_call.1} parent=1 // pred_check
      _
    $region19: #{tpu_custom_call.1} parent=1 // pred_check_branch
      %52 = sbr.rel (0) target = $region21
    $region20: #{tpu_custom_call.1} parent=1 // pred_region
      _
    $region21: #{tpu_custom_call.1} parent=1 // pred_fallthru
      _
    // Predicated region
    $region22: #{tpu_custom_call.1} parent=1 // pred_check
      _
    $region23: #{tpu_custom_call.1} parent=1 // pred_check_branch
      %54 = sbr.rel (0) target = $region25
    $region24: #{tpu_custom_call.1} parent=1 // pred_region
      %55 = dma.done [#allocation3], 256
    $region25: #{tpu_custom_call.1} parent=1 // pred_fallthru
      _
    // Predicated region
    $region26: #{tpu_custom_call.1} parent=1 // pred_check
      _
    $region27: #{tpu_custom_call.1} parent=1 // pred_check_branch
      %57 = sbr.rel (0) target = $region29
    $region28: #{tpu_custom_call.1} parent=1 // pred_region
      %58 = dma.done [#allocation6], 2048
    $region29: #{tpu_custom_call.1} parent=1 // pred_fallthru
      _
    // Predicated region
    $region30: #{tpu_custom_call.1} parent=1 // pred_check
      _
    $region31: #{tpu_custom_call.1} parent=1 // pred_check_branch
      %60 = sbr.rel (0) target = $region33
    $region32: #{tpu_custom_call.1} parent=1 // pred_region
      %61 = dma.done [#allocation6], 2048
    $region33: #{tpu_custom_call.1} parent=1 // pred_fallthru
      _
    %v62 = vld [vmem:[#allocation2] sm:$0xff]
    %v63 = vld [vmem:[#allocation2 + $0x8] sm:$0xff]
    %v64 = vld [vmem:[#allocation5] sm:$0xff]
    %v65 = vld [vmem:[#allocation5 + $0x8] sm:$0xff]
    %v66 = vld [vmem:[#allocation5 + $0x10] sm:$0xff]
    %v67 = vld [vmem:[#allocation5 + $0x18] sm:$0xff]
    %v68 = vld [vmem:[#allocation5 + $0x20] sm:$0xff]
    %v69 = vld [vmem:[#allocation5 + $0x28] sm:$0xff]
    %v70 = vld [vmem:[#allocation5 + $0x30] sm:$0xff]
    %v71 = vld [vmem:[#allocation5 + $0x38] sm:$0xff]
    %v72 = vld [vmem:[#allocation5 + $0x40] sm:$0xff]
    %v73 = vld [vmem:[#allocation5 + $0x48] sm:$0xff]
    %v74 = vld [vmem:[#allocation5 + $0x50] sm:$0xff]
    %v75 = vld [vmem:[#allocation5 + $0x58] sm:$0xff]
    %v76 = vld [vmem:[#allocation5 + $0x60] sm:$0xff]
    %v77 = vld [vmem:[#allocation5 + $0x68] sm:$0xff]
    %v78 = vld [vmem:[#allocation5 + $0x70] sm:$0xff]
    %v79 = vld [vmem:[#allocation5 + $0x78] sm:$0xff]
    %v80 = vld [vmem:[%s2] sm:$0x1]
    %v82 = vlaneseq
    %v83 = vshrl.u32 %v82, 7
    %v84 = vsub.s32 0, %v83
    %v85 = vrot.slane %v80, %v84
    %87 = vmatprep.subr.mxu0 0.0
    %88 = vmatpush1.msra.mxu0 %v64
    %89 = vmatprep.subr.mxu0 0.0
    %90 = vmatpush1.msra.mxu0 %v65
    %91 = vmatprep.subr.mxu0 0.0
    %92 = vmatpush1.msra.mxu0 %v66
    %93 = vmatprep.subr.mxu0 0.0
    %94 = vmatpush1.msra.mxu0 %v67
    %95 = vmatprep.subr.mxu0 0.0
    %96 = vmatpush1.msra.mxu0 %v68
    %97 = vmatprep.subr.mxu0 0.0
    %98 = vmatpush1.msra.mxu0 %v69
    %99 = vmatprep.subr.mxu0 0.0
    %100 = vmatpush1.msra.mxu0 %v70
    %101 = vmatprep.subr.mxu0 0.0
    %102 = vmatpush1.msra.mxu0 %v71
    %103 = vmatprep.subr.mxu0 0.0
    %104 = vmatpush1.msra.mxu0 %v72
    %105 = vmatprep.subr.mxu0 0.0
    %106 = vmatpush1.msra.mxu0 %v73
    %107 = vmatprep.subr.mxu0 0.0
    %108 = vmatpush1.msra.mxu0 %v74
    %109 = vmatprep.subr.mxu0 0.0
    %110 = vmatpush1.msra.mxu0 %v75
    %111 = vmatprep.subr.mxu0 0.0
    %112 = vmatpush1.msra.mxu0 %v76
    %113 = vmatprep.subr.mxu0 0.0
    %114 = vmatpush1.msra.mxu0 %v77
    %115 = vmatprep.subr.mxu0 0.0
    %116 = vmatpush1.msra.mxu0 %v78
    %117 = vmatprep.subr.mxu0 0.0
    %118 = vmatpush1.msra.mxu0 %v79
    %119 = vmatprep.subr.mxu0 0.0
    %120 = vmatpush1.msra.mxu0 0.0
    %121 = vmatprep.subr.mxu0 0.0
    %122 = vmatpush1.msra.mxu0 0.0
    %123 = vmatprep.subr.mxu0 0.0
    %124 = vmatpush1.msra.mxu0 0.0
    %125 = vmatprep.subr.mxu0 0.0
    %126 = vmatpush1.msra.mxu0 0.0
    %127 = vmatprep.subr.mxu0 0.0
    %128 = vmatpush1.msra.mxu0 0.0
    %129 = vmatprep.subr.mxu0 0.0
    %130 = vmatpush1.msra.mxu0 0.0
    %131 = vmatprep.subr.mxu0 0.0
    %132 = vmatpush1.msra.mxu0 0.0
    %133 = vmatprep.subr.mxu0 0.0
    %134 = vmatpush1.msra.mxu0 0.0
    %135 = vmatprep.subr.mxu0 0.0
    %136 = vmatpush1.msra.mxu0 0.0
    %137 = vmatprep.subr.mxu0 0.0
    %138 = vmatpush1.msra.mxu0 0.0
    %139 = vmatprep.subr.mxu0 0.0
    %140 = vmatpush1.msra.mxu0 0.0
    %141 = vmatprep.subr.mxu0 0.0
    %142 = vmatpush1.msra.mxu0 0.0
    %143 = vmatprep.subr.mxu0 0.0
    %144 = vmatpush1.msra.mxu0 0.0
    %145 = vmatprep.subr.mxu0 0.0
    %146 = vmatpush1.msra.mxu0 0.0
    %147 = vmatprep.subr.mxu0 0.0
    %148 = vmatpush1.msra.mxu0 0.0
    %149 = vmatprep.subr.mxu0 0.0
    %150 = vmatpush1.msra.mxu0 0.0
    %151 = vmatprep.mubr.f32.mxu0 0.0
    %152 = vmatmul.mubr.f32.gmra.mrb[0].mxu0 %v62
    %v153 = vpop.f32.mrb[0].mxu0
    %v154 = vadd.f32 %v85, %v153
    %v155 = vpop.f32.mrb[0].mxu0
    %156 = vmatprep.mubr.f32.mxu0 0.0
    %157 = vmatmul.mubr.f32.gmra.mrb[0].mxu0 %v63
    %v158 = vpop.f32.mrb[0].mxu0
    %v159 = vadd.f32 %v85, %v158
    %v160 = vpop.f32.mrb[0].mxu0
    %161 = vdwg.mxu0
    %v162 = vmul.f32 %v154, 0.01
    %v163 = vmul.f32 %v159, 0.01
    %v164 = vmax.f32 %v154, %v162
    %v165 = vmax.f32 %v159, %v163
    %v166 = vld [vmem:[#allocation7] sm:$0xff]
    %v167 = vld [vmem:[#allocation7 + $0x8] sm:$0xff]
    %v168 = vld [vmem:[#allocation7 + $0x10] sm:$0xff]
    %v169 = vld [vmem:[#allocation7 + $0x18] sm:$0xff]
    %v170 = vld [vmem:[#allocation7 + $0x20] sm:$0xff]
    %v171 = vld [vmem:[#allocation7 + $0x28] sm:$0xff]
    %v172 = vld [vmem:[#allocation7 + $0x30] sm:$0xff]
    %v173 = vld [vmem:[#allocation7 + $0x38] sm:$0xff]
    %v174 = vld [vmem:[#allocation7 + $0x40] sm:$0xff]
    %v175 = vld [vmem:[#allocation7 + $0x48] sm:$0xff]
    %v176 = vld [vmem:[#allocation7 + $0x50] sm:$0xff]
    %v177 = vld [vmem:[#allocation7 + $0x58] sm:$0xff]
    %v178 = vld [vmem:[#allocation7 + $0x60] sm:$0xff]
    %v179 = vld [vmem:[#allocation7 + $0x68] sm:$0xff]
    %v180 = vld [vmem:[#allocation7 + $0x70] sm:$0xff]
    %v181 = vld [vmem:[#allocation7 + $0x78] sm:$0xff]
    %v182 = vld [vmem:[%s4] sm:$0x1]
    %v184 = vlaneseq
    %v185 = vshrl.u32 %v184, 7
    %v186 = vsub.s32 0, %v185
    %v187 = vrot.slane %v182, %v186
    %189 = vmatprep.subr.mxu0 0.0
    %190 = vmatpush1.msra.mxu0 %v166
    %191 = vmatprep.subr.mxu0 0.0
    %192 = vmatpush1.msra.mxu0 %v167
    %193 = vmatprep.subr.mxu0 0.0
    %194 = vmatpush1.msra.mxu0 %v168
    %195 = vmatprep.subr.mxu0 0.0
    %196 = vmatpush1.msra.mxu0 %v169
    %197 = vmatprep.subr.mxu0 0.0
    %198 = vmatpush1.msra.mxu0 %v170
    %199 = vmatprep.subr.mxu0 0.0
    %200 = vmatpush1.msra.mxu0 %v171
    %201 = vmatprep.subr.mxu0 0.0
    %202 = vmatpush1.msra.mxu0 %v172
    %203 = vmatprep.subr.mxu0 0.0
    %204 = vmatpush1.msra.mxu0 %v173
    %205 = vmatprep.subr.mxu0 0.0
    %206 = vmatpush1.msra.mxu0 %v174
    %207 = vmatprep.subr.mxu0 0.0
    %208 = vmatpush1.msra.mxu0 %v175
    %209 = vmatprep.subr.mxu0 0.0
    %210 = vmatpush1.msra.mxu0 %v176
    %211 = vmatprep.subr.mxu0 0.0
    %212 = vmatpush1.msra.mxu0 %v177
    %213 = vmatprep.subr.mxu0 0.0
    %214 = vmatpush1.msra.mxu0 %v178
    %215 = vmatprep.subr.mxu0 0.0
    %216 = vmatpush1.msra.mxu0 %v179
    %217 = vmatprep.subr.mxu0 0.0
    %218 = vmatpush1.msra.mxu0 %v180
    %219 = vmatprep.subr.mxu0 0.0
    %220 = vmatpush1.msra.mxu0 %v181
    %221 = vmatprep.subr.mxu0 0.0
    %222 = vmatpush1.msra.mxu0 0.0
    %223 = vmatprep.subr.mxu0 0.0
    %224 = vmatpush1.msra.mxu0 0.0
    %225 = vmatprep.subr.mxu0 0.0
    %226 = vmatpush1.msra.mxu0 0.0
    %227 = vmatprep.subr.mxu0 0.0
    %228 = vmatpush1.msra.mxu0 0.0
    %229 = vmatprep.subr.mxu0 0.0
    %230 = vmatpush1.msra.mxu0 0.0
    %231 = vmatprep.subr.mxu0 0.0
    %232 = vmatpush1.msra.mxu0 0.0
    %233 = vmatprep.subr.mxu0 0.0
    %234 = vmatpush1.msra.mxu0 0.0
    %235 = vmatprep.subr.mxu0 0.0
    %236 = vmatpush1.msra.mxu0 0.0
    %237 = vmatprep.subr.mxu0 0.0
    %238 = vmatpush1.msra.mxu0 0.0
    %239 = vmatprep.subr.mxu0 0.0
    %240 = vmatpush1.msra.mxu0 0.0
    %241 = vmatprep.subr.mxu0 0.0
    %242 = vmatpush1.msra.mxu0 0.0
    %243 = vmatprep.subr.mxu0 0.0
    %244 = vmatpush1.msra.mxu0 0.0
    %245 = vmatprep.subr.mxu0 0.0
    %246 = vmatpush1.msra.mxu0 0.0
    %247 = vmatprep.subr.mxu0 0.0
    %248 = vmatpush1.msra.mxu0 0.0
    %249 = vmatprep.subr.mxu0 0.0
    %250 = vmatpush1.msra.mxu0 0.0
    %251 = vmatprep.subr.mxu0 0.0
    %252 = vmatpush1.msra.mxu0 0.0
    %253 = vmatprep.mubr.f32.mxu0 0.0
    %254 = vmatmul.mubr.f32.gmra.mrb[0].mxu0 %v164
    %v255 = vpop.f32.mrb[0].mxu0
    %v256 = vadd.f32 %v187, %v255
    %v257 = vpop.f32.mrb[0].mxu0
    %258 = vmatprep.mubr.f32.mxu0 0.0
    %259 = vmatmul.mubr.f32.gmra.mrb[0].mxu0 %v165
    %v260 = vpop.f32.mrb[0].mxu0
    %v261 = vadd.f32 %v187, %v260
    %v262 = vpop.f32.mrb[0].mxu0
    %263 = vdwg.mxu0
    %264 = vst [vmem:[#allocation8] sm:$0xff] %v256
    %265 = vst [vmem:[#allocation8 + $0x8] sm:$0xff] %v261
    // Predicated region
    $region34: #{tpu_custom_call.1} parent=1 // pred_check
      _
    $region35: #{tpu_custom_call.1} parent=1 // pred_check_branch
      %267 = sbr.rel (0) target = $region37
    $region36: #{tpu_custom_call.1} parent=1 // pred_region
      %s269 = ssub.s32 256, 256
      %270 = vsyncadd [#allocation4], %s269
      %s271 = sshll.u32 [#allocation8], 4
      %s272 = int_to_ptr.vmem [resolvable:$true] %s271
      %277 = dma.vmem_to_hbm [thread:$0]  %s272, 256, %s5, [#allocation4], 128, 128, 8
    $region37: #{tpu_custom_call.1} parent=1 // pred_fallthru
      _
    // Predicated region
    $region38: #{tpu_custom_call.1} parent=1 // pred_check
      _
    $region39: #{tpu_custom_call.1} parent=1 // pred_check_branch
      %279 = sbr.rel (0) target = $region41
    $region40: #{tpu_custom_call.1} parent=1 // pred_region
      %280 = dma.done [#allocation4], 256
    $region41: #{tpu_custom_call.1} parent=1 // pred_fallthru
      _
    %281 = vsyncpa [#allocation3], 1
    %282 = vsyncpa [#allocation6], 1
    %283 = vsyncpa [#allocation4], 1

</llo_original>
